<compile_context>
chip_gen: v6e
topology: v6e:2x2x1
jax: 0.10.0
libtpu: 0.0.40
codegen_flags: <defaults>
</compile_context>

<pallas_src>
import functools
import math

import jax
import jax.numpy as jnp
from jax.experimental import pallas as pl
from jax.experimental.pallas import tpu as pltpu


# ----------------------------------------------------------------------------
# Buffer construction (mirrors PositionalEncoding.__init__)
# ----------------------------------------------------------------------------
def make_pe_table(d_model: int, max_len: int = 5000) -> jnp.ndarray:
    position = jnp.arange(max_len, dtype=jnp.float32)[:, None]            # [max_len, 1]
    div_term = jnp.exp(
        jnp.arange(0, d_model, 2, dtype=jnp.float32) * (-math.log(10000.0) / d_model)
    )                                                                      # [d_model/2]
    pe = jnp.zeros((max_len, 1, d_model), dtype=jnp.float32)
    pe = pe.at[:, 0, 0::2].set(jnp.sin(position * div_term))
    pe = pe.at[:, 0, 1::2].set(jnp.cos(position * div_term))
    return pe                                                              # [max_len, 1, d_model]


# ----------------------------------------------------------------------------
# Kernels
# ----------------------------------------------------------------------------
def _add_pe_kernel(x_ref, pe_ref, o_ref):
    x = x_ref[...]
    pe = pe_ref[...]
    if pe.ndim < x.ndim:          # 3-D path: pe block is (tile_s, D) -> broadcast over batch
        pe = pe[:, None, :]
    o_ref[...] = x + pe


def _add_pe_dropout_kernel(x_ref, pe_ref, bits_ref, o_ref, *, threshold, inv_keep):
    x = x_ref[...]
    pe = pe_ref[...]
    if pe.ndim < x.ndim:
        pe = pe[:, None, :]
    y = x + pe
    # keep with probability 1 - p:  P(bits >= round(p * 2^32)) = 1 - p
    keep = bits_ref[...] >= jnp.uint32(threshold)
    o_ref[...] = jnp.where(keep, y * jnp.asarray(inv_keep, y.dtype), jnp.zeros_like(y))


# ----------------------------------------------------------------------------
# Tiling helper
# ----------------------------------------------------------------------------
def _pick_tile_rows(num_rows: int, bytes_per_row: int,
                    target_bytes: int = 2 << 20, align: int = 8) -> int:
    """Largest row tile that (a) divides num_rows, (b) is a multiple of `align`
    or the full extent, (c) keeps the block <= target_bytes, preferring >=4
    (then >=2) grid steps so the BlockSpec pipeline actually overlaps DMA."""
    cands = [t for t in range(1, num_rows + 1)
             if num_rows % t == 0 and (t % align == 0 or t == num_rows)]
    fitting = [t for t in cands if t * bytes_per_row <= target_bytes]
    if not fitting:
        return min(cands)  # TODO(synk): very long rows could still exceed VMEM here
    for min_steps in (4, 2):
        tier = [t for t in fitting if num_rows // t >= min_steps]
        if tier:
            return max(tier)
    return max(fitting)


# ----------------------------------------------------------------------------
# Wrapper (forward pass)
# ----------------------------------------------------------------------------
def positional_encoding(
    x: jnp.ndarray,             # [seq_len, batch, d_model]
    pe: jnp.ndarray,            # [max_len, 1, d_model]
    *,
    p: float = 0.1,
    training: bool = False,
    rng: jax.Array | None = None,   # fresh key per call when training
) -> jnp.ndarray:
    S, B, D = x.shape
    dtype = x.dtype
    itemsize = jnp.dtype(dtype).itemsize
    pe_s = pe[:S, 0, :].astype(dtype)                     # dense [S, D], x's dtype

    use_dropout = training and p > 0.0
    if use_dropout and p >= 1.0:
        return jnp.zeros_like(x)

    min_sublanes = max(8, 32 // itemsize)                 # 8 (f32) / 16 (bf16) / 32 (int8)
    compiler_params = pltpu.CompilerParams(
        dimension_semantics=("parallel",),                # independent steps; v7x dual-TC
        vmem_limit_bytes=32 * 1024 * 1024,                # safe on v5e/v6e/v7x
    )

    if B < min_sublanes:
        # ---- small batch: flatten to [S*B, D] for dense sublane packing ----
        R = S * B
        x_in = x.reshape(R, D)
        pe_in = jnp.repeat(pe_s, B, axis=0)               # row s*B+b -> pe[s]
        tile = _pick_tile_rows(R, D * itemsize)
        grid = (R // tile,)
        spec = pl.BlockSpec((tile, D), lambda i: (i, 0))
        x_spec, pe_spec, o_spec = spec, spec, spec
        bits_shape = (R, D)
        out_shape = jax.ShapeDtypeStruct((R, D), dtype)
        reshape_out = lambda o: o.reshape(S, B, D)
    else:
        # ---- big batch: keep [S, B, D]; pe block (tile, D) broadcast in-kernel ----
        x_in = x
        pe_in = pe_s
        tile = _pick_tile_rows(S, B * D * itemsize)
        grid = (S // tile,)
        x_spec = pl.BlockSpec((tile, B, D), lambda i: (i, 0, 0))
        pe_spec = pl.BlockSpec((tile, D), lambda i: (i, 0))
        o_spec = pl.BlockSpec((tile, B, D), lambda i: (i, 0, 0))
        bits_shape = (S, B, D)
        out_shape = jax.ShapeDtypeStruct((S, B, D), dtype)
        reshape_out = lambda o: o

    if not use_dropout:
        out = pl.pallas_call(
            _add_pe_kernel,
            out_shape=out_shape,
            grid=grid,
            in_specs=[x_spec, pe_spec],
            out_specs=o_spec,
            compiler_params=compiler_params,
        )(x_in, pe_in)
        return reshape_out(out)

    # training: inverted dropout with uint32 threshold compare
    if rng is None:
        rng = jax.random.PRNGKey(0)  # TODO(synk): caller should thread a fresh key per call/layer
    bits = jax.random.bits(rng, bits_shape, dtype=jnp.uint32)
    threshold = min(int(round(p * float(1 << 32))), (1 << 32) - 1)
    inv_keep = 1.0 / (1.0 - p)

    out = pl.pallas_call(
        functools.partial(_add_pe_dropout_kernel, threshold=threshold, inv_keep=inv_keep),
        out_shape=out_shape,
        grid=grid,
        in_specs=[x_spec, pe_spec, x_spec.__class__(x_spec.block_shape, x_spec.index_map)],
        out_specs=o_spec,
        compiler_params=compiler_params,
    )(x_in, pe_in, bits)
    return reshape_out(out)


# ----------------------------------------------------------------------------
# Demo / self-test
# ----------------------------------------------------------------------------
if __name__ == "__main__":
    SEQ, BATCH, D_MODEL = 8, 2, 32
    MAX_LEN = 64
    P_DROP = 0.1

    key = jax.random.PRNGKey(0)
    k_x, k_drop = jax.random.split(key)
    x = jax.random.normal(k_x, (SEQ, BATCH, D_MODEL), dtype=jnp.float32)
    pe = make_pe_table(D_MODEL, MAX_LEN)
    ref = x + pe[:SEQ]                                   # pure-JAX reference (eval mode)

    # eval mode: dropout is identity
    out_eval = jax.block_until_ready(positional_encoding(x, pe, p=P_DROP, training=False))
    assert out_eval.shape == (SEQ, BATCH, D_MODEL)
    assert jnp.allclose(out_eval, ref, atol=1e-6, rtol=1e-6), "eval mismatch vs reference"

    # training mode: every element is either dropped (0) or scaled by 1/(1-p)
    out_train = jax.block_until_ready(
        positional_encoding(x, pe, p=P_DROP, training=True, rng=k_drop)
    )
    assert out_train.shape == (SEQ, BATCH, D_MODEL)
    scaled = ref / (1.0 - P_DROP)
    ok = jnp.isclose(out_train, 0.0, atol=1e-6) | jnp.isclose(out_train, scaled, atol=1e-5, rtol=1e-5)
    assert bool(jnp.all(ok)), "training output not consistent with inverted dropout"

    print("KERNEL_OK")
</pallas_src>

<mosaic_0001>
module attributes {stable_mosaic.version = 11 : i64} {
  func.func @_add_pe_kernel(%arg0: i32, %arg1: memref<8x32xf32, #tpu.memory_space<vmem>>, %arg2: memref<8x32xf32, #tpu.memory_space<vmem>>, %arg3: memref<8x32xf32, #tpu.memory_space<vmem>>) attributes {dimension_semantics = [#tpu.dimension_semantics<parallel>], iteration_bounds = array<i64: 2>, scalar_prefetch = 0 : i64, scratch_operands = 0 : i64, tpu.core_type = #tpu.core_type<tc>, window_params = [{transform_indices = @transform_0, window_bounds = array<i64: 8, 32>}, {transform_indices = @transform_1, window_bounds = array<i64: 8, 32>}, {transform_indices = @transform_2, window_bounds = array<i64: 8, 32>}]} {
    %c0 = arith.constant 0 : index
    %c0_0 = arith.constant 0 : index
    %0 = vector.load %arg1[%c0, %c0_0] : memref<8x32xf32, #tpu.memory_space<vmem>>, vector<8x32xf32>
    %c0_1 = arith.constant 0 : index
    %c0_2 = arith.constant 0 : index
    %1 = vector.load %arg2[%c0_1, %c0_2] : memref<8x32xf32, #tpu.memory_space<vmem>>, vector<8x32xf32>
    %2 = arith.addf %0, %1 : vector<8x32xf32>
    %c0_3 = arith.constant 0 : index
    %c0_4 = arith.constant 0 : index
    %3 = vector.load %arg3[%c0_3, %c0_4] : memref<8x32xf32, #tpu.memory_space<vmem>>, vector<8x32xf32>
    tpu.vector_store %arg3[%c0_3, %c0_4], %2 {strides = array<i32>} : memref<8x32xf32, #tpu.memory_space<vmem>>, vector<8x32xf32>,
    return
  }
  func.func @transform_0(%arg0: i32) -> (i32, i32) {
    %c0_i32 = arith.constant 0 : i32
    %c0_i32_0 = arith.constant 0 : i32
    return %arg0, %c0_i32 : i32, i32
  }
  func.func @transform_1(%arg0: i32) -> (i32, i32) {
    %c0_i32 = arith.constant 0 : i32
    %c0_i32_0 = arith.constant 0 : i32
    return %arg0, %c0_i32 : i32, i32
  }
  func.func @transform_2(%arg0: i32) -> (i32, i32) {
    %c0_i32 = arith.constant 0 : i32
    %c0_i32_0 = arith.constant 0 : i32
    return %arg0, %c0_i32 : i32, i32
  }
}

</mosaic_0001>

<llo_original>
// kernel: tpu_custom_call.1
$region0: #{tpu_custom_call.1}
  #allocation0 [shape = 'u32[]', space=smem, size = 0x4, offset = 0x4, fixed_abs, tag = 'smem constant byte address 0x4 - core index']
  #allocation1 [shape = 'u32[144,128]{1,0:T(1,128)}', space=vmem, size = 0x12000, scoped, tag = 'internal scratch']
  %s0 = inlined_call_operand.hbm [shape: f32[16,32], index: 0, kind: input, shape index: {}]
  %s1 = inlined_call_operand.hbm [shape: f32[16,32], index: 1, kind: input, shape index: {}]
  %s2 = inlined_call_operand.hbm [shape: f32[16,32], index: 2, kind: output, shape index: {}]
  %s3 = sld [smem:[#allocation0]]
  $region49: #{tpu_custom_call.1} parent=0
    _
  %s5 = ssub.s32 1, %s3
  %s6 = scalar_select 0, %s5, %s3
  $region1: #{tpu_custom_call.1} parent=0
    #allocation2 [shape = 'u8[8192]{0}', space=vmem, size = 0x2000, scoped, tag = 'input window, operand 0']
    #allocation3 [shape = 's32[2]{0}', space=sflag, size = 0x8, scoped, tag = 'scoped memory for tpu_custom_call.1']
    #allocation4 [shape = 's32[2]{0}', space=sflag, size = 0x8, scoped, tag = 'scoped memory for tpu_custom_call.1']
    #allocation5 [shape = 'u8[8192]{0}', space=vmem, size = 0x2000, scoped, tag = 'input window, operand 1']
    #allocation6 [shape = 's32[2]{0}', space=sflag, size = 0x8, scoped, tag = 'scoped memory for tpu_custom_call.1']
    #allocation7 [shape = 'u8[8192]{0}', space=vmem, size = 0x2000, scoped, tag = 'output window, operand 0']
    %7 = vsyncpa [#allocation3], 0
    %s8 = scalar_lea.sflag [#allocation3], 1
    %9 = vsyncpa %s8, 0
    %10 = vsyncpa [#allocation6], 0
    %s11 = scalar_lea.sflag [#allocation6], 1
    %12 = vsyncpa %s11, 0
    %13 = vsyncpa [#allocation4], 0
    %s14 = scalar_lea.sflag [#allocation4], 1
    %15 = vsyncpa %s14, 0
    loop: start=0, step=1, limit=4
    $region2: #{tpu_custom_call.1} parent=1 // loop_pre_header
      _
    $region3: #{tpu_custom_call.1} parent=1 // loop_header
      %s17 = sphi 0, %s21
      %p18 = scmp.ge.s32.totalorder %s17, 4
      %s27 = sphi 0, %s29
      %s30 = sphi 0, %s27
      %s31 = sphi 0, %s30
      %s47 = sphi 0, %s31
      %s53 = sphi 0, %s55
      %s56 = sphi 0, %s53
      %s57 = sphi 0, %s56
      %s73 = sphi 0, %s57
      %s79 = sphi 0, %s81
      %s82 = sphi 0, %s79
      %s83 = sphi 0, %s82
      %s99 = sphi 0, %s83
    $region4: #{tpu_custom_call.1} parent=1 // loop_header_branch
      %20 = sbr.rel (%p18) target = $region8
    $region5: #{tpu_custom_call.1} parent=1 // loop_body
      %s22 = ssub.s32 %s17, 1
      %s23 = ssub.s32 %s17, 2
      %s24 = sadd.s32 %s17, 1
      %s25 = ssub.s32 %s17, %s24
      %p26 = scmp.eq.s32.totalorder %s25, 0
      %s28 = sadd.s32 %s27, 1
      %s29 = scalar_select %p26, %s27, %s28
      %p32 = pneg %p26
      %p33 = scmp.eq.s32.totalorder %s17, 1
      %p34 = por %p32, %p33
      %p35 = scmp.ne.s32.totalorder %s27, %s30
      %p36 = scmp.eq.s32.totalorder %s17, 0
      %p37 = por %p35, %p36
      %p38 = scmp.ne.s32.totalorder %s27, %s30
      %p39 = scmp.eq.s32.totalorder %s22, 1
      %p40 = por %p38, %p39
      %p41 = scmp.ne.s32.totalorder %s30, %s31
      %p42 = scmp.eq.s32.totalorder %s22, 0
      %p43 = por %p41, %p42
      %p44 = scmp.ne.s32.totalorder %s30, %s31
      %p45 = scmp.eq.s32.totalorder %s23, 1
      %p46 = por %p44, %p45
      %p48 = scmp.ne.s32.totalorder %s31, %s47
      %p49 = scmp.eq.s32.totalorder %s23, 0
      %p50 = por %p48, %p49
      %s51 = ssub.s32 %s17, %s24
      %p52 = scmp.eq.s32.totalorder %s51, 0
      %s54 = sadd.s32 %s53, 1
      %s55 = scalar_select %p52, %s53, %s54
      %p58 = pneg %p52
      %p59 = scmp.eq.s32.totalorder %s17, 1
      %p60 = por %p58, %p59
      %p61 = scmp.ne.s32.totalorder %s53, %s56
      %p62 = scmp.eq.s32.totalorder %s17, 0
      %p63 = por %p61, %p62
      %p64 = scmp.ne.s32.totalorder %s53, %s56
      %p65 = scmp.eq.s32.totalorder %s22, 1
      %p66 = por %p64, %p65
      %p67 = scmp.ne.s32.totalorder %s56, %s57
      %p68 = scmp.eq.s32.totalorder %s22, 0
      %p69 = por %p67, %p68
      %p70 = scmp.ne.s32.totalorder %s56, %s57
      %p71 = scmp.eq.s32.totalorder %s23, 1
      %p72 = por %p70, %p71
      %p74 = scmp.ne.s32.totalorder %s57, %s73
      %p75 = scmp.eq.s32.totalorder %s23, 0
      %p76 = por %p74, %p75
      %s77 = ssub.s32 %s17, %s24
      %p78 = scmp.eq.s32.totalorder %s77, 0
      %s80 = sadd.s32 %s79, 1
      %s81 = scalar_select %p78, %s79, %s80
      %p84 = pneg %p78
      %p85 = scmp.eq.s32.totalorder %s17, 1
      %p86 = por %p84, %p85
      %p87 = scmp.ne.s32.totalorder %s79, %s82
      %p88 = scmp.eq.s32.totalorder %s17, 0
      %p89 = por %p87, %p88
      %p90 = scmp.ne.s32.totalorder %s79, %s82
      %p91 = scmp.eq.s32.totalorder %s22, 1
      %p92 = por %p90, %p91
      %p93 = scmp.ne.s32.totalorder %s82, %s83
      %p94 = scmp.eq.s32.totalorder %s22, 0
      %p95 = por %p93, %p94
      %p96 = scmp.ne.s32.totalorder %s82, %s83
      %p97 = scmp.eq.s32.totalorder %s23, 1
      %p98 = por %p96, %p97
      %p100 = scmp.ne.s32.totalorder %s83, %s99
      %p101 = scmp.eq.s32.totalorder %s23, 0
      %p102 = por %p100, %p101
      %p103 = scmp.le.s32.totalorder 1, %s17
      %p104 = scmp.lt.s32.totalorder %s17, 3
      %p105 = pnand %p103, %p104
      %p106 = pneg %p105
      // Predicated region
      $region9: #{tpu_custom_call.1} parent=5 // pred_check
        _
      $region10: #{tpu_custom_call.1} parent=5 // pred_check_branch
        %108 = sbr.rel (%p105) target = $region12
      $region11: #{tpu_custom_call.1} parent=5 // pred_region
        %s109 = ssub.s32 %s17, 1
      $region12: #{tpu_custom_call.1} parent=5 // pred_fallthru
        _
      %p110 = scmp.lt.s32.totalorder %s17, 2
      // Predicated region
      $region13: #{tpu_custom_call.1} parent=5 // pred_check
        %p111 = pneg %p110
      $region14: #{tpu_custom_call.1} parent=5 // pred_check_branch
        %113 = sbr.rel (%p111) target = $region16
      $region15: #{tpu_custom_call.1} parent=5 // pred_region
        // Predicated region
        $region17: #{tpu_custom_call.1} parent=15 // pred_check
          %p114 = pneg %p37
        $region18: #{tpu_custom_call.1} parent=15 // pred_check_branch
          %116 = sbr.rel (%p114) target = $region20
        $region19: #{tpu_custom_call.1} parent=15 // pred_region
          %s117 = sand.u32 %s27, 1
          %s118 = scalar_lea.sflag [#allocation3], %s117
          %s119 = sand.u32 %s27, 1
          %s120 = smul.addr %s119, 8
          %s121 = scalar_lea.vmem [#allocation2], %s120
          %s123 = ssub.s32 128, 128
          %124 = vsyncadd %s118, %s123
          %s125 = smul.addr %s17, 128
          %s126 = scalar_lea.hbm %s0, %s125
          %s128 = sshll.u32 %s121, 4
          %s129 = int_to_ptr.vmem [resolvable:$true] %s128
          %131 = dma.hbm_to_vmem [thread:$0]  %s126, 128, %s129, %s118
        $region20: #{tpu_custom_call.1} parent=15 // pred_fallthru
          _
        // Predicated region
        $region21: #{tpu_custom_call.1} parent=15 // pred_check
          %p132 = pneg %p63
        $region22: #{tpu_custom_call.1} parent=15 // pred_check_branch
          %134 = sbr.rel (%p132) target = $region24
        $region23: #{tpu_custom_call.1} parent=15 // pred_region
          %s135 = sand.u32 %s53, 1
          %s136 = scalar_lea.sflag [#allocation6], %s135
          %s137 = sand.u32 %s53, 1
          %s138 = smul.addr %s137, 8
          %s139 = scalar_lea.vmem [#allocation5], %s138
          %s141 = ssub.s32 128, 128
          %142 = vsyncadd %s136, %s141
          %s143 = smul.addr %s17, 128
          %s144 = scalar_lea.hbm %s1, %s143
          %s146 = sshll.u32 %s139, 4
          %s147 = int_to_ptr.vmem [resolvable:$true] %s146
          %149 = dma.hbm_to_vmem [thread:$0]  %s144, 128, %s147, %s136
        $region24: #{tpu_custom_call.1} parent=15 // pred_fallthru
          _
      $region16: #{tpu_custom_call.1} parent=5 // pred_fallthru
        _
      %p150 = scmp.le.s32.totalorder 1, %s17
      %p151 = scmp.lt.s32.totalorder %s17, 3
      %p152 = pnand %p150, %p151
      %p153 = pneg %p152
      // Predicated region
      $region25: #{tpu_custom_call.1} parent=5 // pred_check
        _
      $region26: #{tpu_custom_call.1} parent=5 // pred_check_branch
        %155 = sbr.rel (%p152) target = $region28
      $region27: #{tpu_custom_call.1} parent=5 // pred_region
        %s156 = ssub.s32 %s17, 1
        %s157 = sand.u32 %s30, 1
        %s158 = scalar_lea.sflag [#allocation3], %s157
        %s159 = sand.u32 %s30, 1
        %s160 = smul.addr %s159, 8
        %s161 = scalar_lea.vmem [#allocation2], %s160
        // Predicated region
        $region29: #{tpu_custom_call.1} parent=27 // pred_check
          %p162 = pneg %p43
        $region30: #{tpu_custom_call.1} parent=27 // pred_check_branch
          %164 = sbr.rel (%p162) target = $region32
        $region31: #{tpu_custom_call.1} parent=27 // pred_region
          %165 = dma.done %s158, 128
        $region32: #{tpu_custom_call.1} parent=27 // pred_fallthru
          _
        %s166 = sand.u32 %s56, 1
        %s167 = scalar_lea.sflag [#allocation6], %s166
        %s168 = sand.u32 %s56, 1
        %s169 = smul.addr %s168, 8
        %s170 = scalar_lea.vmem [#allocation5], %s169
        // Predicated region
        $region33: #{tpu_custom_call.1} parent=27 // pred_check
          %p171 = pneg %p69
        $region34: #{tpu_custom_call.1} parent=27 // pred_check_branch
          %173 = sbr.rel (%p171) target = $region36
        $region35: #{tpu_custom_call.1} parent=27 // pred_region
          %174 = dma.done %s167, 128
        $region36: #{tpu_custom_call.1} parent=27 // pred_fallthru
          _
        %s175 = sand.u32 %s30, 1
        %s176 = scalar_lea.sflag [#allocation3], %s175
        %s177 = sand.u32 %s30, 1
        %s178 = smul.addr %s177, 8
        %s179 = scalar_lea.vmem [#allocation2], %s178
        %p180 = pneg %p43
        %p181 = pneg %p40
        %s182 = sand.u32 %s56, 1
        %s183 = scalar_lea.sflag [#allocation6], %s182
        %s184 = sand.u32 %s56, 1
        %s185 = smul.addr %s184, 8
        %s186 = scalar_lea.vmem [#allocation5], %s185
        %p187 = pneg %p69
        %p188 = pneg %p66
        %p189 = pneg %p95
        %p190 = pneg %p92
        %s191 = sand.u32 %s82, 1
        %s192 = scalar_lea.sflag [#allocation4], %s191
        %s193 = sand.u32 %s82, 1
        %s194 = smul.addr %s193, 8
        %s195 = scalar_lea.vmem [#allocation7], %s194
        %v196 = vld [vmem:[%s161] sm:$0xff]
        %v197 = vld [vmem:[%s170] sm:$0xff]
        %v198 = vadd.f32 %v196, %v197
        %vm199 = vcmask 261120
        %200 = vst.msk [vmem:[%s195] sm:$0xff] %vm199, %v198
        %s201 = sand.u32 %s82, 1
        %s202 = scalar_lea.sflag [#allocation4], %s201
        %s203 = sand.u32 %s82, 1
        %s204 = smul.addr %s203, 8
        %s205 = scalar_lea.vmem [#allocation7], %s204
        // Predicated region
        $region37: #{tpu_custom_call.1} parent=27 // pred_check
          %p206 = pneg %p92
        $region38: #{tpu_custom_call.1} parent=27 // pred_check_branch
          %208 = sbr.rel (%p206) target = $region40
        $region39: #{tpu_custom_call.1} parent=27 // pred_region
          %s210 = ssub.s32 128, 128
          %211 = vsyncadd %s202, %s210
          %s212 = smul.addr %s22, 128
          %s213 = scalar_lea.hbm %s2, %s212
          %s215 = sshll.u32 %s205, 4
          %s216 = int_to_ptr.vmem [resolvable:$true] %s215
          %218 = dma.vmem_to_hbm [thread:$0]  %s216, 128, %s213, %s202
        $region40: #{tpu_custom_call.1} parent=27 // pred_fallthru
          _
      $region28: #{tpu_custom_call.1} parent=5 // pred_fallthru
        _
      %p219 = scmp.le.s32.totalorder 2, %s17
      // Predicated region
      $region41: #{tpu_custom_call.1} parent=5 // pred_check
        %p220 = pneg %p219
      $region42: #{tpu_custom_call.1} parent=5 // pred_check_branch
        %222 = sbr.rel (%p220) target = $region44
      $region43: #{tpu_custom_call.1} parent=5 // pred_region
        %s223 = ssub.s32 %s17, 2
        // Predicated region
        $region45: #{tpu_custom_call.1} parent=43 // pred_check
          %p224 = pneg %p98
        $region46: #{tpu_custom_call.1} parent=43 // pred_check_branch
          %226 = sbr.rel (%p224) target = $region48
        $region47: #{tpu_custom_call.1} parent=43 // pred_region
          %s227 = sand.u32 %s83, 1
          %s228 = scalar_lea.sflag [#allocation4], %s227
          %s229 = sand.u32 %s83, 1
          %s230 = smul.addr %s229, 8
          %s231 = scalar_lea.vmem [#allocation7], %s230
          %232 = dma.done %s228, 128
        $region48: #{tpu_custom_call.1} parent=43 // pred_fallthru
          _
      $region44: #{tpu_custom_call.1} parent=5 // pred_fallthru
        _
    $region6: #{tpu_custom_call.1} parent=1 // loop_footer
      %s21 = sadd.s32 1, %s17
    $region7: #{tpu_custom_call.1} parent=1 // loop_footer_branch
      %16 = sbr.rel target = $region3
    $region8: #{tpu_custom_call.1} parent=1 // loop_exit
      _
    %233 = vsyncpa [#allocation3], 1
    %s234 = scalar_lea.sflag [#allocation3], 1
    %235 = vsyncpa %s234, 1
    %236 = vsyncpa [#allocation6], 1
    %s237 = scalar_lea.sflag [#allocation6], 1
    %238 = vsyncpa %s237, 1
    %239 = vsyncpa [#allocation4], 1
    %s240 = scalar_lea.sflag [#allocation4], 1
    %241 = vsyncpa %s240, 1

</llo_original>
